<compile_context>
chip_gen: v7x
topology: tpu7x:2x2x1
jax: 0.10.0
libtpu: 0.0.40
codegen_flags: <defaults>
</compile_context>

<pallas_src>
import functools
from enum import Enum

import numpy as np

import jax
import jax.numpy as jnp
from jax.experimental import pallas as pl
from jax.experimental.pallas import tpu as pltpu

CNNL_DIM_MAX = 8


class reshapeFormat(Enum):
    Split = 0
    Merge = 1
    Insert = 2
    Eliminate = 3


# ----------------------------------------------------------------------------
# Exact ports of the module's random-parameter helpers.  They only look at
# .ndim / .shape, so they work identically on numpy index arrays and jnp
# arrays, and they consume np.random in exactly the PyTorch module's order.
# ----------------------------------------------------------------------------
def get_permute_parameter(x):
    dim_vec = np.arange(x.ndim)
    np.random.shuffle(dim_vec)
    return list(dim_vec)


def get_reshape_parameter(x):
    tensor_size = list(x.shape)
    reshape_format = np.random.randint(
        reshapeFormat.Split.value, reshapeFormat.Eliminate.value + 1
    )
    if len(tensor_size) in (0, 1):
        reshape_format = reshapeFormat.Insert.value
        dim = 0
    elif len(tensor_size) >= CNNL_DIM_MAX:
        reshape_format = reshapeFormat.Eliminate.value
        dim = np.random.randint(0, CNNL_DIM_MAX)
    else:
        dim = np.random.randint(0, len(tensor_size))

    if reshape_format == reshapeFormat.Split.value:
        if len(tensor_size) == CNNL_DIM_MAX:
            return tensor_size
        base_split_value = 0
        for i in range(2, 6):
            if tensor_size[dim] % i == 0:
                base_split_value = i
                break
        if base_split_value != 0:
            tensor_size[dim] = int(tensor_size[dim] / base_split_value)
            tensor_size.insert(dim, base_split_value)
        return tensor_size
    elif reshape_format == reshapeFormat.Merge.value:
        another_dim = dim + 1 if dim == 0 else dim - 1
        tensor_size[dim] *= tensor_size[another_dim]
        tensor_size.pop(another_dim)
        return tensor_size
    elif reshape_format == reshapeFormat.Insert.value:
        insert_num = np.random.randint(0, 3)
        insert_num = (
            CNNL_DIM_MAX - len(tensor_size)
            if len(tensor_size) + insert_num > CNNL_DIM_MAX
            else insert_num
        )
        for _ in range(insert_num):
            tensor_size.insert(dim, 1)
        return tensor_size
    else:
        pop_num = np.random.randint(0, 3)
        remove_value = 1
        for _ in range(pop_num):
            if remove_value in tensor_size:
                tensor_size.remove(remove_value)
        return tensor_size


def get_select_parameter(x):
    tensor_size = list(x.shape)
    dim_value = 1
    flag = 0
    if len(tensor_size) == 0:
        return (0, 0)
    dim = np.random.randint(0, len(tensor_size))
    while dim_value <= 1 and flag < len(tensor_size):
        dim = 0 if dim == len(tensor_size) - 1 else dim + 1
        dim_value = tensor_size[dim]
        flag += 1
    if dim_value == 1:
        return (0, 0)
    index = np.random.randint(1, dim_value)
    return (dim, index)


# ----------------------------------------------------------------------------
# Tiling helpers.
# ----------------------------------------------------------------------------
_TARGET_BLOCK_BYTES = 4 * 1024 * 1024   # ~4 MiB per block buffer
_SPLIT_BYTES = 8 * 1024 * 1024          # only use a multi-step grid above this
_VMEM_CAP_BYTES = 32 * 1024 * 1024      # scoped default on v6e/v7x; half v7x VMEM


def _sublane_multiple(dtype):
    # Packed sub-32-bit dtypes need sublane counts that are multiples of
    # 8 * (4 / itemsize): f32 -> 8, bf16 -> 16, int8/fp8 -> 32.
    return max(8, 32 // jnp.dtype(dtype).itemsize)


def _lane_dense_cols(n):
    # Widest multiple-of-128 column count that exactly divides n (0 if none).
    for cand in (8192, 4096, 2048, 1024, 512, 256, 128):
        if n % cand == 0:
            return cand
    return 0


def _vmem_limit(block_bytes):
    # 2 double-buffered input blocks + 2 output blocks + headroom, clamped so
    # we never request more than half of v7x's 64 MiB physical VMEM.
    need = 4 * block_bytes
    return int(min(max(need + need // 4 + (1 << 20), 4 << 20), _VMEM_CAP_BYTES))


# ----------------------------------------------------------------------------
# Pallas kernels.
# ----------------------------------------------------------------------------
def _add_one_kernel(x_ref, o_ref):
    o_ref[...] = x_ref[...] + jnp.asarray(1, dtype=o_ref.dtype)


def _add_one_chunk_kernel(x_ref, o_ref):
    # x_ref block is (1, rows, C): the selected chunk; drop the chunk axis.
    o_ref[...] = x_ref[0] + jnp.asarray(1, dtype=o_ref.dtype)


def _add_one_slab(slab):
    """+1 over a lane-dense (R, C) slab (C % 128 == 0): 1 HBM read + 1 write."""
    R, C = slab.shape
    dtype = slab.dtype
    itemsize = jnp.dtype(dtype).itemsize
    sub = _sublane_multiple(dtype)
    slab_bytes = R * C * itemsize
    max_rows = max(sub, (_TARGET_BLOCK_BYTES // (C * itemsize)) // sub * sub)

    if R <= max_rows and slab_bytes < _SPLIT_BYTES:
        # Small slab: one block, one grid step.  No forced 2-way split -- on
        # single-TC v5e/v6e extra grid steps are pure per-step overhead.
        return pl.pallas_call(
            _add_one_kernel,
            out_shape=jax.ShapeDtypeStruct((R, C), dtype),
            input_output_aliases={0: 0},
            compiler_params=pltpu.CompilerParams(
                vmem_limit_bytes=_vmem_limit(slab_bytes)),
        )(slab)

    # Large slab: row-tiled grid with >= 8 roughly equal blocks so v7x's two
    # TensorCores get balanced work; rows rounded to the dtype's packed
    # sublane multiple so stores stay full-width / unmasked.
    n_blocks = max(pl.cdiv(R, max_rows), 8)
    rpb = ((pl.cdiv(R, n_blocks) + sub - 1) // sub) * sub
    rpb = max(sub, min(rpb, max_rows, R))
    return pl.pallas_call(
        _add_one_kernel,
        out_shape=jax.ShapeDtypeStruct((R, C), dtype),
        grid=(pl.cdiv(R, rpb),),
        in_specs=[pl.BlockSpec((rpb, C), lambda i: (i, 0))],
        out_specs=pl.BlockSpec((rpb, C), lambda i: (i, 0)),
        input_output_aliases={0: 0},
        compiler_params=pltpu.CompilerParams(
            dimension_semantics=("parallel",),
            vmem_limit_bytes=_vmem_limit(rpb * C * itemsize)),
    )(slab)


def _add_one_flat(flat):
    """Fallback when numel is not a multiple of 128: tile a (1, n) view with
    lane blocks (partial last block is masked).  Never a single whole-array
    VMEM block, so large inputs cannot OOM v7x's 64 MiB VMEM."""
    _, n = flat.shape
    dtype = flat.dtype
    itemsize = jnp.dtype(dtype).itemsize
    # A (1, k) block occupies ~8x its nominal bytes in VMEM (sublane padding);
    # size blocks against the padded footprint.
    padded = 8 * itemsize
    if n * padded <= _TARGET_BLOCK_BYTES:
        return pl.pallas_call(
            _add_one_kernel,
            out_shape=jax.ShapeDtypeStruct((1, n), dtype),
            input_output_aliases={0: 0},
        )(flat)
    bc = max(128, (_TARGET_BLOCK_BYTES // padded) // 128 * 128)
    # TODO(synk): a divisor-based (R, C) factorization would use all 8 sublanes;
    # (1, n) lane-tiling is kept simple since this module's outputs always have
    # numel % 128 == 0 and never hit this path.
    return pl.pallas_call(
        _add_one_kernel,
        out_shape=jax.ShapeDtypeStruct((1, n), dtype),
        grid=(pl.cdiv(n, bc),),
        in_specs=[pl.BlockSpec((1, bc), lambda i: (0, i))],
        out_specs=pl.BlockSpec((1, bc), lambda i: (0, i)),
        input_output_aliases={0: 0},
        compiler_params=pltpu.CompilerParams(
            dimension_semantics=("parallel",),
            vmem_limit_bytes=_vmem_limit(bc * padded)),
    )(flat)


def add_one_pallas(x):
    """Elementwise +1: exactly one HBM read + one HBM write of x."""
    orig_shape = x.shape
    n = int(np.prod(orig_shape)) if x.ndim > 0 else 1
    C = _lane_dense_cols(n)
    if C == 0:
        out = _add_one_flat(jnp.reshape(x, (1, n)))
    else:
        out = _add_one_slab(jnp.reshape(x, (n // C, C)))
    return jnp.reshape(out, orig_shape)


def _fused_select_add_one(x, out_shape, start, length):
    """Single-HBM-pass path: out == x.ravel()[start:start+length] + 1 reshaped
    to out_shape.  Used when trace-time analysis proves the whole chain is a
    value-order-preserving view of a contiguous chunk of x.  The select offset
    is folded into the BlockSpec index_map, so the kernel reads the chunk
    straight out of x and writes the lane-dense output (no transpose copy)."""
    dtype = x.dtype
    itemsize = jnp.dtype(dtype).itemsize
    total = int(x.size)
    C = _lane_dense_cols(length)        # caller guarantees length % 128 == 0
    R = length // C
    chunk = start // length             # caller guarantees start % length == 0
    sub = _sublane_multiple(dtype)
    xv = jnp.reshape(x, (total // length, R, C))   # free row-major view of x
    max_rows = max(sub, (_TARGET_BLOCK_BYTES // (C * itemsize)) // sub * sub)
    chunk_bytes = length * itemsize

    if R <= max_rows and chunk_bytes < _SPLIT_BYTES:
        out = pl.pallas_call(
            _add_one_chunk_kernel,
            out_shape=jax.ShapeDtypeStruct((R, C), dtype),
            grid=(1,),
            in_specs=[pl.BlockSpec((1, R, C), lambda i: (chunk, 0, 0))],
            out_specs=pl.BlockSpec((R, C), lambda i: (0, 0)),
            compiler_params=pltpu.CompilerParams(
                vmem_limit_bytes=_vmem_limit(chunk_bytes)),
        )(xv)
    else:
        n_blocks = max(pl.cdiv(R, max_rows), 8)
        rpb = ((pl.cdiv(R, n_blocks) + sub - 1) // sub) * sub
        rpb = max(sub, min(rpb, max_rows, R))
        out = pl.pallas_call(
            _add_one_chunk_kernel,
            out_shape=jax.ShapeDtypeStruct((R, C), dtype),
            grid=(pl.cdiv(R, rpb),),
            in_specs=[pl.BlockSpec((1, rpb, C), lambda i: (chunk, i, 0))],
            out_specs=pl.BlockSpec((rpb, C), lambda i: (i, 0)),
            compiler_params=pltpu.CompilerParams(
                dimension_semantics=("parallel",),
                vmem_limit_bytes=_vmem_limit(rpb * C * itemsize)),
        )(xv)
    return jnp.reshape(out, out_shape)


# ----------------------------------------------------------------------------
# View-chain planning (host side) + forward.
# ----------------------------------------------------------------------------
def _plan_view_chain(shape):
    """Draw the random view-chain parameters (consuming np.random exactly like
    the PyTorch module) by running the chain on a host-side index array.
    Returns (ops, out_shape, flat_idx) with out.ravel()[j] == x.ravel()[flat_idx[j]]."""
    n = int(np.prod(shape)) if len(shape) else 1
    idx = np.arange(n, dtype=np.int64).reshape(shape)
    ops = []
    dim, index = get_select_parameter(idx)
    if idx.ndim != 0:
        idx = idx[(slice(None),) * int(dim) + (int(index),)]
        ops.append(("select", (int(dim), int(index))))
    for kind in ("permute", "permute", "reshape", "reshape",
                 "permute", "reshape", "permute", "reshape"):
        if kind == "permute":
            p = tuple(int(v) for v in get_permute_parameter(idx))
            idx = np.transpose(idx, p)
        else:
            p = tuple(int(v) for v in get_reshape_parameter(idx))
            idx = np.reshape(idx, p)
        ops.append((kind, p))
    return tuple(ops), tuple(int(d) for d in idx.shape), np.ravel(idx)


@functools.lru_cache(maxsize=128)
def _build_chain_add_one(ops, in_shape, dtype_name):
    """Jitted 'replay the view chain, then +1 in Pallas' for one chain plan.
    Jitting fuses the permute/reshape chain into (at most) one XLA copy fusion
    instead of one HBM round-trip per transpose."""
    del in_shape, dtype_name  # only part of the cache key

    def fn(x):
        for kind, param in ops:
            if kind == "select":
                d, i = param
                x = x[(slice(None),) * d + (i,)]
            elif kind == "permute":
                x = jnp.transpose(x, param)
            else:
                x = jnp.reshape(x, param)
        return add_one_pallas(x)

    # Callers jitting a larger computation can additionally donate x
    # (jax.jit donate_argnums) so the aliased Pallas output reuses buffers.
    return jax.jit(fn)


def view_chain7_forward(x):
    """ViewChain7.forward: random select/permute/reshape chain, then x + 1."""
    ops, out_shape, flat_idx = _plan_view_chain(tuple(int(d) for d in x.shape))
    n_out = int(flat_idx.size)
    start = int(flat_idx[0]) if n_out else 0

    # Single-HBM-pass fast path: chain is a value-order-preserving view of a
    # contiguous chunk of x -> fold select + chain + (+1) into one Pallas pass.
    if (n_out > 0 and n_out % 128 == 0 and int(x.size) % n_out == 0
            and start % n_out == 0
            and bool(np.array_equal(
                flat_idx, np.arange(start, start + n_out, dtype=np.int64)))):
        return _fused_select_add_one(x, out_shape, start, n_out)

    # Generic path: the chain induces an arbitrary element permutation, which a
    # BlockSpec index_map cannot express without a gather; replay it as one
    # jitted XLA copy fusion feeding a single Pallas +1 pass (2 HBM passes).
    # TODO(synk): a fully general 1-pass kernel would need an in-kernel gather
    # of the trace-time permutation; index traffic + TPU gather cost make that
    # a loss for this memory-bound op.
    fn = _build_chain_add_one(ops, tuple(int(d) for d in x.shape), str(x.dtype))
    return fn(x)


def _reference_forward(x):
    """Plain-JAX mirror of the PyTorch module (test reference only)."""
    dim, index = get_select_parameter(x)
    if x.ndim != 0:
        x = x[(slice(None),) * int(dim) + (int(index),)]
    x = jnp.transpose(x, get_permute_parameter(x))
    x = jnp.transpose(x, get_permute_parameter(x))
    x = jnp.reshape(x, get_reshape_parameter(x))
    x = jnp.reshape(x, get_reshape_parameter(x))
    x = jnp.transpose(x, get_permute_parameter(x))
    x = jnp.reshape(x, get_reshape_parameter(x))
    x = jnp.transpose(x, get_permute_parameter(x))
    x = jnp.reshape(x, get_reshape_parameter(x))
    return x + 1.0


if __name__ == "__main__":
    key = jax.random.PRNGKey(0)
    x = jax.random.normal(key, (2, 4, 16, 16), dtype=jnp.float32)

    # Deterministic random view-chain parameters (module uses np.random).
    np.random.seed(0)
    out = jax.block_until_ready(view_chain7_forward(x))

    # Reference: identical chain (same seed), +1 done in plain JAX.
    np.random.seed(0)
    ref = jax.block_until_ready(_reference_forward(x))

    assert out.shape == ref.shape, (out.shape, ref.shape)
    np.testing.assert_allclose(np.asarray(out), np.asarray(ref), rtol=1e-6, atol=1e-6)

    print("KERNEL_OK")
</pallas_src>

<mosaic_0001>
module attributes {stable_mosaic.version = 11 : i64} {
  func.func @_add_one_kernel(%arg0: memref<1x512xf32, #tpu.memory_space<vmem>>, %arg1: memref<1x512xf32, #tpu.memory_space<vmem>>) attributes {dimension_semantics = [], scalar_prefetch = 0 : i64, scratch_operands = 0 : i64, tpu.core_type = #tpu.core_type<tc>} {
    %c0 = arith.constant 0 : index
    %c0_0 = arith.constant 0 : index
    %0 = vector.load %arg0[%c0, %c0_0] : memref<1x512xf32, #tpu.memory_space<vmem>>, vector<1x512xf32>
    %cst = arith.constant 1.000000e+00 : f32
    %1 = vector.broadcast %cst : f32 to vector<1x512xf32>
    %2 = arith.addf %0, %1 : vector<1x512xf32>
    %c0_1 = arith.constant 0 : index
    %c0_2 = arith.constant 0 : index
    %3 = vector.load %arg1[%c0_1, %c0_2] : memref<1x512xf32, #tpu.memory_space<vmem>>, vector<1x512xf32>
    tpu.vector_store %arg1[%c0_1, %c0_2], %2 {strides = array<i32>} : memref<1x512xf32, #tpu.memory_space<vmem>>, vector<1x512xf32>,
    return
  }
}

</mosaic_0001>

<llo_original>
// kernel: fn.1
$region0: #{fn.1}
  #allocation0 [shape = 'u32[]', space=smem, size = 0x4, offset = 0x4, fixed_abs, tag = 'smem constant byte address 0x4 - core index']
  #allocation1 [shape = 'u32[144,128]{1,0:T(1,128)}', space=vmem, size = 0x12000, scoped, tag = 'internal scratch']
  %s0 = inlined_call_operand.vmem [shape: f32[1,512], index: 0, kind: input, shape index: {}, may-alias: {0,1}]
  %s1 = inlined_call_operand.vmem [shape: f32[1,512], index: 1, kind: output, shape index: {}, may-alias: {0,1}]
  %s2 = sld [smem:[#allocation0]]
  $region14: #{fn.1} parent=0
    _
  %s4 = ssub.s32 1, %s2
  %s5 = scalar_select 0, %s4, %s2
  // Predicated region
  $region2: #{fn.1} parent=0 // pred_check
    _
  $region3: #{fn.1} parent=0 // pred_check_branch
    %7 = sbr.rel (0) target = $region5
  $region4: #{fn.1} parent=0 // pred_region
    _
  $region5: #{fn.1} parent=0 // pred_fallthru
    _
  %v8 = vld [vmem:[%s0] sm:$0xf]
  %v9 = vadd.f32 %v8, 1.0
  %v10 = vlaneseq
  %vm11 = vcmp.ge.s32.totalorder %v10, 0
  %vm12 = vcmp.lt.s32.totalorder %v10, 512
  %vm13 = vmand %vm11, %vm12
  %14 = vst.msk [vmem:[%s1] sm:$0xf] %vm13, %v9
  // Predicated region
  $region6: #{fn.1} parent=0 // pred_check
    _
  $region7: #{fn.1} parent=0 // pred_check_branch
    %16 = sbr.rel (0) target = $region9
  $region8: #{fn.1} parent=0 // pred_region
    _
  $region9: #{fn.1} parent=0 // pred_fallthru
    _
  // Predicated region
  $region10: #{fn.1} parent=0 // pred_check
    _
  $region11: #{fn.1} parent=0 // pred_check_branch
    %18 = sbr.rel (0) target = $region13
  $region12: #{fn.1} parent=0 // pred_region
    _
  $region13: #{fn.1} parent=0 // pred_fallthru
    _

</llo_original>
